<compile_context>
chip_gen: v7x
topology: tpu7x:2x2x1
jax: 0.10.0
libtpu: 0.0.40
codegen_flags: <defaults>
</compile_context>

<pallas_src>
import functools

import jax
import jax.numpy as jnp
from jax.experimental import pallas as pl
from jax.experimental.pallas import tpu as pltpu


def _int_pow(x, n: int):
    """x ** n for a static positive integer n using only VPU multiplies."""
    result = None
    base = x
    while n:
        if n & 1:
            result = base if result is None else result * base
        n >>= 1
        if n:
            base = base * base
    return result


def _gem_kernel(p_ref, x_ref, o_ref, acc_ref, *, eps, hw, hw_tile, p_static,
                need_mask):
    # p_ref   : SMEM (1, 1) f32 scalar (ignored when p_static is not None)
    # x_ref   : VMEM (row_tile, hw_tile) tile of the flattened input
    # o_ref   : VMEM (row_tile, 1) pooled output tile (written on last k step)
    # acc_ref : VMEM (row_tile, 1) f32 running sum of clamp(x, eps) ** p
    k = pl.program_id(1)

    @pl.when(k == 0)
    def _():
        acc_ref[...] = jnp.zeros_like(acc_ref)

    x = x_ref[...].astype(jnp.float32)
    xc = jnp.maximum(x, eps)                        # clamp(min=eps)
    if p_static is not None:
        xp = _int_pow(xc, p_static)                 # VPU-only, no transcendentals
    else:
        xp = jnp.power(xc, p_ref[0, 0])             # runtime-learned p
    if need_mask:
        # Zero the undefined tail columns of the last (partial) hw block.
        col = k * hw_tile + jax.lax.broadcasted_iota(jnp.int32, xp.shape, 1)
        xp = jnp.where(col < hw, xp, 0.0)
    acc_ref[...] += jnp.sum(xp, axis=-1, keepdims=True)

    @pl.when(k == pl.num_programs(1) - 1)
    def _():
        m = acc_ref[...] * (1.0 / hw)               # mean over the true H*W
        if p_static is not None:
            inv_p = 1.0 / p_static
        else:
            inv_p = 1.0 / p_ref[0, 0]
        # Final root touches only row_tile elements per row block -> negligible.
        o_ref[...] = jnp.power(m, inv_p).astype(o_ref.dtype)


def _choose_tiles(rows, hw, itemsize):
    # Keep the double-buffered input (2 * row_tile * hw_tile * itemsize) near
    # 8 MiB: comfortably inside the default scoped VMEM on every generation
    # (v5e 16 MiB, v6e/v7x 32 MiB) yet large enough to amortize per-step
    # pipeline overhead and sit near the HBM roofline.
    HW_TILE_CAP = 2048                     # multiple of 128
    PER_BUFFER_BYTES = 4 * 1024 * 1024
    hw_tile = hw if hw <= HW_TILE_CAP else HW_TILE_CAP
    rows_by_budget = max(8, (PER_BUFFER_BYTES // (hw_tile * itemsize)) // 8 * 8)
    rows_padded = ((rows + 7) // 8) * 8
    row_tile = min(1024, rows_by_budget, rows_padded)
    return row_tile, hw_tile


def gem_pallas(x, p, eps=1e-6):
    """GeM forward. x: (N, C, H, W); p: Python number (static) or jax scalar."""
    N, C, H, W = x.shape
    rows, hw = N * C, H * W
    x2 = x.reshape(rows, hw)               # free, contiguous reshape

    # Static-integer p (the default GeM p=3) takes the transcendental-free path.
    p_static = None
    if isinstance(p, (int, float)) and float(p) == int(p) and int(p) >= 1:
        p_static = int(p)
    p_arr = jnp.reshape(jnp.asarray(p, jnp.float32), (1, 1))

    row_tile, hw_tile = _choose_tiles(rows, hw, x2.dtype.itemsize)
    grid = (pl.cdiv(rows, row_tile), pl.cdiv(hw, hw_tile))
    need_mask = (hw % hw_tile) != 0

    kernel = functools.partial(
        _gem_kernel, eps=float(eps), hw=hw, hw_tile=hw_tile,
        p_static=p_static, need_mask=need_mask)

    out = pl.pallas_call(
        kernel,
        out_shape=jax.ShapeDtypeStruct((rows, 1), x.dtype),
        grid=grid,
        in_specs=[
            pl.BlockSpec(memory_space=pltpu.MemorySpace.SMEM),        # p scalar
            pl.BlockSpec((row_tile, hw_tile), lambda i, k: (i, k)),   # x tile
        ],
        out_specs=pl.BlockSpec((row_tile, 1), lambda i, k: (i, 0)),
        scratch_shapes=[pltpu.VMEM((row_tile, 1), jnp.float32)],
        compiler_params=pltpu.CompilerParams(
            dimension_semantics=("parallel", "arbitrary")),
    )(p_arr, x2)

    return out.reshape(N, C, 1, 1)


def gem_reference(x, p, eps=1e-6):
    """Pure-JAX reference mirroring the PyTorch gem()."""
    xc = jnp.maximum(x, eps)
    xp = jnp.power(xc, p)
    m = jnp.mean(xp, axis=(-2, -1), keepdims=True)
    return jnp.power(m, 1.0 / p)


if __name__ == "__main__":
    eps = 1e-6
    key = jax.random.PRNGKey(0)
    x = jax.random.uniform(key, (2, 4, 16, 16), dtype=jnp.float32)

    # Default GeM init: p = ones(1) * 3  -> static-integer fast path.
    out = jax.block_until_ready(gem_pallas(x, 3, eps=eps))
    ref = gem_reference(x, 3.0, eps=eps)
    assert out.shape == (2, 4, 1, 1), out.shape
    assert jnp.allclose(out, ref, rtol=1e-5, atol=1e-5)

    # Runtime (trainable) p path: p comes in as a traced scalar via SMEM.
    p_rt = jnp.float32(3.0)
    out_rt = jax.block_until_ready(gem_pallas(x, p_rt, eps=eps))
    assert jnp.allclose(out_rt, ref, rtol=1e-5, atol=1e-5)

    # Awkward shape: rows not a multiple of the tile, classic 7x7 feature map.
    x_odd = jax.random.uniform(jax.random.PRNGKey(0), (3, 5, 7, 7),
                               dtype=jnp.float32)
    out_odd = jax.block_until_ready(gem_pallas(x_odd, 3, eps=eps))
    assert jnp.allclose(out_odd, gem_reference(x_odd, 3.0, eps=eps),
                        rtol=1e-5, atol=1e-5)

    # Large spatial extent: exercises the hw reduction grid axis + column mask.
    x_big = jax.random.uniform(jax.random.PRNGKey(0), (1, 2, 48, 64),
                               dtype=jnp.float32)
    out_big = jax.block_until_ready(gem_pallas(x_big, 3, eps=eps))
    assert jnp.allclose(out_big, gem_reference(x_big, 3.0, eps=eps),
                        rtol=1e-5, atol=1e-5)

    print("KERNEL_OK")
</pallas_src>

<mosaic_0001>
module attributes {stable_mosaic.version = 11 : i64} {
  func.func @_gem_kernel(%arg0: i32, %arg1: i32, %arg2: memref<1x1xf32, #tpu.memory_space<smem>>, %arg3: memref<8x256xf32, #tpu.memory_space<vmem>>, %arg4: memref<8x1xf32, #tpu.memory_space<vmem>>, %arg5: memref<8x1xf32, #tpu.memory_space<vmem>>) attributes {dimension_semantics = [#tpu.dimension_semantics<parallel>, #tpu.dimension_semantics<arbitrary>], iteration_bounds = array<i64: 1, 1>, scalar_prefetch = 0 : i64, scratch_operands = 1 : i64, tpu.core_type = #tpu.core_type<tc>, window_params = [{transform_indices = @transform_0, window_bounds = array<i64: 1, 1>}, {transform_indices = @transform_1, window_bounds = array<i64: 8, 256>}, {transform_indices = @transform_2, window_bounds = array<i64: 8, 1>}]} {
    %c0_i32 = arith.constant 0 : i32
    %0 = arith.cmpi eq, %arg1, %c0_i32 : i32
    %1 = arith.extui %0 : i1 to i32
    %c0_i32_0 = arith.constant 0 : i32
    %2 = arith.cmpi ne, %1, %c0_i32_0 : i32
    scf.if %2 {
      %cst_9 = arith.constant 0.000000e+00 : f32
      %16 = vector.broadcast %cst_9 : f32 to vector<8x1xf32>
      %c0_10 = arith.constant 0 : index
      %c0_11 = arith.constant 0 : index
      %17 = vector.load %arg5[%c0_10, %c0_11] : memref<8x1xf32, #tpu.memory_space<vmem>>, vector<8x1xf32>
      tpu.vector_store %arg5[%c0_10, %c0_11], %16 {strides = array<i32>} : memref<8x1xf32, #tpu.memory_space<vmem>>, vector<8x1xf32>,
    } else {
    }
    %c0 = arith.constant 0 : index
    %c0_1 = arith.constant 0 : index
    %3 = vector.load %arg3[%c0, %c0_1] : memref<8x256xf32, #tpu.memory_space<vmem>>, vector<8x256xf32>
    %cst = arith.constant 9.99999997E-7 : f32
    %4 = vector.broadcast %cst : f32 to vector<8x256xf32>
    %5 = arith.maximumf %3, %4 : vector<8x256xf32>
    %6 = arith.mulf %5, %5 : vector<8x256xf32>
    %7 = arith.mulf %5, %6 : vector<8x256xf32>
    %c0_2 = arith.constant 0 : index
    %c0_3 = arith.constant 0 : index
    %8 = vector.load %arg5[%c0_2, %c0_3] : memref<8x1xf32, #tpu.memory_space<vmem>>, vector<8x1xf32>
    %cst_4 = arith.constant dense<0.000000e+00> : vector<8xf32>
    %9 = vector.multi_reduction <add>, %7, %cst_4 [1] : vector<8x256xf32> to vector<8xf32>
    %10 = vector.shape_cast %9 : vector<8xf32> to vector<8x1xf32>
    %11 = arith.addf %8, %10 : vector<8x1xf32>
    %c0_5 = arith.constant 0 : index
    %c0_6 = arith.constant 0 : index
    %12 = vector.load %arg5[%c0_5, %c0_6] : memref<8x1xf32, #tpu.memory_space<vmem>>, vector<8x1xf32>
    tpu.vector_store %arg5[%c0_5, %c0_6], %11 {strides = array<i32>} : memref<8x1xf32, #tpu.memory_space<vmem>>, vector<8x1xf32>,
    %c0_i32_7 = arith.constant 0 : i32
    %13 = arith.cmpi eq, %arg1, %c0_i32_7 : i32
    %14 = arith.extui %13 : i1 to i32
    %c0_i32_8 = arith.constant 0 : i32
    %15 = arith.cmpi ne, %14, %c0_i32_8 : i32
    scf.if %15 {
      %c0_9 = arith.constant 0 : index
      %c0_10 = arith.constant 0 : index
      %16 = vector.load %arg5[%c0_9, %c0_10] : memref<8x1xf32, #tpu.memory_space<vmem>>, vector<8x1xf32>
      %cst_11 = arith.constant 3.906250e-03 : f32
      %17 = vector.broadcast %cst_11 : f32 to vector<8x1xf32>
      %18 = arith.mulf %16, %17 : vector<8x1xf32>
      %cst_12 = arith.constant 0.333333343 : f32
      %19 = vector.broadcast %cst_12 : f32 to vector<8x1xf32>
      %20 = math.powf %18, %19 : vector<8x1xf32>
      %c0_13 = arith.constant 0 : index
      %c0_14 = arith.constant 0 : index
      %21 = vector.load %arg4[%c0_13, %c0_14] : memref<8x1xf32, #tpu.memory_space<vmem>>, vector<8x1xf32>
      tpu.vector_store %arg4[%c0_13, %c0_14], %20 {strides = array<i32>} : memref<8x1xf32, #tpu.memory_space<vmem>>, vector<8x1xf32>,
    } else {
    }
    return
  }
  func.func @transform_0(%arg0: i32, %arg1: i32) -> (i32, i32) {
    %c0_i32 = arith.constant 0 : i32
    %c0_i32_0 = arith.constant 0 : i32
    %c0_i32_1 = arith.constant 0 : i32
    return %c0_i32, %c0_i32_0 : i32, i32
  }
  func.func @transform_1(%arg0: i32, %arg1: i32) -> (i32, i32) {
    %c0_i32 = arith.constant 0 : i32
    return %arg0, %arg1 : i32, i32
  }
  func.func @transform_2(%arg0: i32, %arg1: i32) -> (i32, i32) {
    %c0_i32 = arith.constant 0 : i32
    %c0_i32_0 = arith.constant 0 : i32
    return %arg0, %c0_i32 : i32, i32
  }
}

</mosaic_0001>

<llo_original>
// kernel: tpu_custom_call.1
$region0: #{tpu_custom_call.1}
  #allocation0 [shape = 'u32[]', space=smem, size = 0x4, offset = 0x4, fixed_abs, tag = 'smem constant byte address 0x4 - core index']
  #allocation1 [shape = 'u32[144,128]{1,0:T(1,128)}', space=vmem, size = 0x12000, scoped, tag = 'internal scratch']
  #allocation2 [shape = 'f32[8,1]{1,0:T(8,128)}', space=vmem, size = 0x1000, scoped, tag = 'scratch operand']
  #allocation3 [shape = 'f32[1,1]{1,0:T(1,128)S(6)}', space=smem, size = 0x200, scoped, tag = 'scoped memory for tpu_custom_call.1']
  %s0 = inlined_call_operand.<no memory space> [shape: f32[1,1], index: 0, kind: input, shape index: {}]
  %s1 = inlined_call_operand.hbm [shape: f32[8,256], index: 1, kind: input, shape index: {}]
  %s2 = inlined_call_operand.vmem [shape: f32[8,1], index: 2, kind: output, shape index: {}]
  %s3 = sld [smem:[#allocation0]]
  $region30: #{tpu_custom_call.1} parent=0
    _
  %s5 = ssub.s32 1, %s3
  %s6 = scalar_select 0, %s5, %s3
  %7 = sst [smem:[#allocation3]] %s0
  $region1: #{tpu_custom_call.1} parent=0
    #allocation4 [shape = 'u8[8192]{0}', space=vmem, size = 0x2000, scoped, tag = 'input window, operand 1, single buffered']
    #allocation5 [shape = 's32[1]{0}', space=sflag, size = 0x4, scoped, tag = 'scoped memory for tpu_custom_call.1']
    %8 = vsyncpa [#allocation5], 0
    // Predicated region
    $region2: #{tpu_custom_call.1} parent=1 // pred_check
      _
    $region3: #{tpu_custom_call.1} parent=1 // pred_check_branch
      %10 = sbr.rel (0) target = $region5
    $region4: #{tpu_custom_call.1} parent=1 // pred_region
      _
    $region5: #{tpu_custom_call.1} parent=1 // pred_fallthru
      _
    // Predicated region
    $region6: #{tpu_custom_call.1} parent=1 // pred_check
      _
    $region7: #{tpu_custom_call.1} parent=1 // pred_check_branch
      %12 = sbr.rel (0) target = $region9
    $region8: #{tpu_custom_call.1} parent=1 // pred_region
      %s14 = ssub.s32 256, 256
      %15 = vsyncadd [#allocation5], %s14
      %s17 = sshll.u32 [#allocation4], 4
      %s18 = int_to_ptr.vmem [resolvable:$true] %s17
      %20 = dma.hbm_to_vmem [thread:$0]  %s1, 256, %s18, [#allocation5]
    $region9: #{tpu_custom_call.1} parent=1 // pred_fallthru
      _
    // Predicated region
    $region10: #{tpu_custom_call.1} parent=1 // pred_check
      _
    $region11: #{tpu_custom_call.1} parent=1 // pred_check_branch
      %22 = sbr.rel (0) target = $region13
    $region12: #{tpu_custom_call.1} parent=1 // pred_region
      %23 = dma.done [#allocation5], 256
    $region13: #{tpu_custom_call.1} parent=1 // pred_fallthru
      _
    %p24 = scmp.eq.s32.totalorder 0, 0
    // Predicated region
    $region14: #{tpu_custom_call.1} parent=1 // pred_check
      %p25 = pneg %p24
    $region15: #{tpu_custom_call.1} parent=1 // pred_check_branch
      %27 = sbr.rel (%p25) target = $region17
    $region16: #{tpu_custom_call.1} parent=1 // pred_region
      %vm28 = vcmask 7168
      %29 = vst.msk [vmem:[#allocation2] sm:$0xff] %vm28, 0.0
    $region17: #{tpu_custom_call.1} parent=1 // pred_fallthru
      _
    %v30 = vld [vmem:[#allocation4] sm:$0xff]
    %v31 = vld [vmem:[#allocation4 + $0x8] sm:$0xff]
    %v32 = vmax.f32 %v30, 1e-06
    %v33 = vmax.f32 %v31, 1e-06
    %v34 = vmul.f32 %v32, %v32
    %v35 = vmul.f32 %v33, %v33
    %v36 = vmul.f32 %v32, %v34
    %v37 = vmul.f32 %v33, %v35
    %v38 = vld [vmem:[#allocation2] sm:$0xff]
    %v39 = vadd.f32 %v36, %v37
    %40 = vadd.xlane.f32.xlu0 %v39
    %v41 = vpop.xlane.xlu0 %40
    %v42 = vadd.f32 %v38, %v41
    %vm43 = vcmask 7168
    %44 = vst.msk [vmem:[#allocation2] sm:$0xff] %vm43, %v42
    // Predicated region
    $region18: #{tpu_custom_call.1} parent=1 // pred_check
      %p45 = pneg %p24
    $region19: #{tpu_custom_call.1} parent=1 // pred_check_branch
      %47 = sbr.rel (%p45) target = $region21
    $region20: #{tpu_custom_call.1} parent=1 // pred_region
      %v48 = vld [vmem:[#allocation2] sm:$0xff]
      %v49 = vmul.f32 %v48, 0.00390625
      %v50 = vpow.f32 %v49, 0.33333334
      %51 = vst.msk [vmem:[%s2] sm:$0xff] %vm43, %v50
    $region21: #{tpu_custom_call.1} parent=1 // pred_fallthru
      _
    // Predicated region
    $region22: #{tpu_custom_call.1} parent=1 // pred_check
      _
    $region23: #{tpu_custom_call.1} parent=1 // pred_check_branch
      %53 = sbr.rel (0) target = $region25
    $region24: #{tpu_custom_call.1} parent=1 // pred_region
      _
    $region25: #{tpu_custom_call.1} parent=1 // pred_fallthru
      _
    // Predicated region
    $region26: #{tpu_custom_call.1} parent=1 // pred_check
      _
    $region27: #{tpu_custom_call.1} parent=1 // pred_check_branch
      %55 = sbr.rel (0) target = $region29
    $region28: #{tpu_custom_call.1} parent=1 // pred_region
      _
    $region29: #{tpu_custom_call.1} parent=1 // pred_fallthru
      _
    %56 = vsyncpa [#allocation5], 1

</llo_original>
